<compile_context>
chip_gen: v5e
topology: v5e:2x2
jax: 0.10.0
libtpu: 0.0.40
codegen_flags: <defaults>
</compile_context>

<pallas_src>
import math
import functools

import jax
import jax.numpy as jnp
from jax import lax
from jax.experimental import pallas as pl
from jax.experimental.pallas import tpu as pltpu


# ---------------------------------------------------------------------------
# helpers
# ---------------------------------------------------------------------------
def _round_up(n, m):
    return ((n + m - 1) // m) * m


def _choose_row_tile(rows):
    """Row tile: multiple of 8, aims for grid >= 2 (v7x megacore) and <= 512."""
    if rows >= 1024:
        return 512
    if rows <= 8:
        return 8
    return max(8, _round_up((rows + 1) // 2, 8))


# ---------------------------------------------------------------------------
# Fused kernel: packed 3-head MLP chain + selective final ReLU + dropout.
# ---------------------------------------------------------------------------
def _fused_mlp_kernel(seed_ref, x_ref, *refs, num_layers, relu_lo, relu_hi,
                      dropout_p):
    out_ref = refs[-1]
    params = refs[:-1]  # w0, b0, w1, b1, ...

    h = x_ref[...].astype(jnp.float32)
    for i in range(num_layers):
        w = params[2 * i][...]                       # (in, out) bf16, packed
        b = params[2 * i + 1][...]                   # (1, out) f32, packed
        h = jnp.dot(h.astype(w.dtype), w,
                    preferred_element_type=jnp.float32) + b
        if i < num_layers - 1:
            h = jnp.maximum(h, 0.0)                  # ReLU between layers

    # Final activation: ReLU only on the w_adj head's column block
    # (activation=F.relu for mlp_w_adj; mlp_x / mlp_mask have none).
    col = lax.broadcasted_iota(jnp.int32, h.shape, 1)
    relu_cols = (col >= relu_lo) & (col < relu_hi)
    h = jnp.where(relu_cols, jnp.maximum(h, 0.0), h)

    if dropout_p > 0.0:
        # Inverted dropout (F.dropout default training=True semantics).
        # Counter-based hash PRNG: unique counter per (global row, column),
        # mixed with the scalar-prefetched seed -> reusable compiled kernel.
        keep = 1.0 - float(dropout_p)
        row_tile, out_width = h.shape
        row0 = pl.program_id(0) * row_tile
        rows = lax.broadcasted_iota(jnp.int32, h.shape, 0) + row0
        idx = (rows * out_width + col).astype(jnp.uint32)
        seed_u = seed_ref[0].astype(jnp.uint32)
        x = idx ^ (seed_u * jnp.uint32(0x9E3779B1) + jnp.uint32(0x85EBCA6B))
        x = x ^ (x >> 16)
        x = x * jnp.uint32(0x7FEB352D)
        x = x ^ (x >> 15)
        x = x * jnp.uint32(0x846CA68B)
        bits = x ^ (x >> 16)
        thresh = jnp.uint32(min(int(keep * 4294967296.0), 4294967295))
        h = jnp.where(bits < thresh, h * (1.0 / keep), 0.0)

    out_ref[...] = h.astype(out_ref.dtype)


def fused_mlp_forward(z2d, packed_w, packed_b, *, relu_lo, relu_hi,
                      dropout_p, seed, row_tile=None):
    """Run the packed 3-head MLP (+ selective ReLU + dropout) as one pallas_call."""
    rows, z_dim = z2d.shape
    num_layers = len(packed_w)
    out_width = packed_w[-1].shape[1]            # padded to a multiple of 128

    if row_tile is None:
        row_tile = _choose_row_tile(rows)
    row_tile = max(8, _round_up(row_tile, 8))
    padded_rows = _round_up(rows, row_tile)
    if padded_rows != rows:
        z2d = jnp.pad(z2d, ((0, padded_rows - rows), (0, 0)))
    grid = (padded_rows // row_tile,)

    in_specs = [pl.BlockSpec((row_tile, z_dim), lambda i, *_: (i, 0))]
    operands = [z2d]
    for w, b in zip(packed_w, packed_b):
        in_specs.append(pl.BlockSpec(w.shape, lambda i, *_: (0, 0)))  # resident
        in_specs.append(pl.BlockSpec(b.shape, lambda i, *_: (0, 0)))  # resident
        operands.append(w)
        operands.append(b)

    kernel = functools.partial(
        _fused_mlp_kernel,
        num_layers=num_layers,
        relu_lo=int(relu_lo),
        relu_hi=int(relu_hi),
        dropout_p=float(dropout_p),
    )

    # Explicit VMEM budget (BlockSpec double-buffers every operand).
    param_bytes = sum(int(a.size) * a.dtype.itemsize for a in packed_w + packed_b)
    act_bytes = row_tile * (z_dim + out_width) * 4
    est = 2 * (param_bytes + act_bytes)
    vmem_limit = int(min(max(est + (16 << 20), 32 << 20), 48 << 20))

    out = pl.pallas_call(
        kernel,
        grid_spec=pltpu.PrefetchScalarGridSpec(
            num_scalar_prefetch=1,
            grid=grid,
            in_specs=in_specs,
            out_specs=pl.BlockSpec((row_tile, out_width), lambda i, *_: (i, 0)),
        ),
        out_shape=jax.ShapeDtypeStruct((padded_rows, out_width), jnp.float32),
        compiler_params=pltpu.CompilerParams(
            dimension_semantics=("parallel",),
            vmem_limit_bytes=vmem_limit,
        ),
    )(jnp.asarray([seed], jnp.int32), *operands)
    return out[:rows]


# ---------------------------------------------------------------------------
# Parameter construction (mirrors MLPLayer.__init__): xavier_uniform with
# gain=calculate_gain('relu')=sqrt(2), zero biases.  Weights are stored
# (in_dim, out_dim) so x @ W + b == x @ W_pt.T + b_pt.
# ---------------------------------------------------------------------------
def init_mlp_params(key, dims):
    gain = math.sqrt(2.0)
    weights, biases = [], []
    for in_dim, out_dim in zip(dims, dims[1:]):
        key, sub = jax.random.split(key)
        bound = gain * math.sqrt(6.0 / (in_dim + out_dim))
        w = jax.random.uniform(sub, (in_dim, out_dim), jnp.float32, -bound, bound)
        b = jnp.zeros((1, out_dim), jnp.float32)
        weights.append(w)
        biases.append(b)
    return weights, biases, key


def _pack_heads(head_ws, head_bs, last_out_offsets, last_out_width):
    """Pack the 3 heads' per-layer weights: layer 0 concatenated along N,
    deeper layers block-diagonal; all packed dims padded to 128 multiples.
    Padded rows/cols are zero, so they contribute nothing (ReLU(0)=0)."""
    num_heads = len(head_ws)
    num_layers = len(head_ws[0])
    packed_w, packed_b = [], []
    in_offsets = [0] * num_heads          # layer 0: all heads read the same z
    in_dim = head_ws[0][0].shape[0]
    for l in range(num_layers):
        ins = [head_ws[k][l].shape[0] for k in range(num_heads)]
        outs = [head_ws[k][l].shape[1] for k in range(num_heads)]
        if l == num_layers - 1:
            out_offsets = list(last_out_offsets)
            out_dim = last_out_width
        else:
            out_offsets = [sum(outs[:k]) for k in range(num_heads)]
            out_dim = _round_up(sum(outs), 128)
        W = jnp.zeros((in_dim, out_dim), jnp.float32)
        B = jnp.zeros((1, out_dim), jnp.float32)
        for k in range(num_heads):
            W = W.at[in_offsets[k]:in_offsets[k] + ins[k],
                     out_offsets[k]:out_offsets[k] + outs[k]].set(head_ws[k][l])
            B = B.at[:, out_offsets[k]:out_offsets[k] + outs[k]].set(head_bs[k][l])
        packed_w.append(W.astype(jnp.bfloat16))   # bf16 MXU operands
        packed_b.append(B)                         # f32 bias (added post-accum)
        in_offsets = out_offsets
        in_dim = out_dim
    return packed_w, packed_b


class GANGeneratorPallas:
    def __init__(self, max_num_nodes, x_dim, z_dim, mlp_dims, dropout=0.1, key=None):
        self.max_num_nodes = max_num_nodes
        self.x_dim = x_dim
        self.dropout = float(dropout)
        if key is None:
            key = jax.random.PRNGKey(0)
        wx, bx, key = init_mlp_params(key, [z_dim] + list(mlp_dims) + [x_dim])
        ww, bw, key = init_mlp_params(key, [z_dim] + list(mlp_dims) + [max_num_nodes])
        wm, bm, key = init_mlp_params(key, [z_dim] + list(mlp_dims) + [2])
        # Packed output layout: [x (x_dim) | w_adj (max_num_nodes) | mask (2) | pad]
        self.out_offsets = (0, x_dim, x_dim + max_num_nodes)
        self.logical_out = x_dim + max_num_nodes + 2
        self.out_width = _round_up(self.logical_out, 128)
        self.packed_w, self.packed_b = _pack_heads(
            [wx, ww, wm], [bx, bw, bm], self.out_offsets, self.out_width)

    def __call__(self, z, seed=0, row_tile=None, training=True):
        # z: (batch, max_num_nodes, z_dim)
        lead = z.shape[:-1]
        z2d = z.reshape(-1, z.shape[-1])
        # TODO(synk): the reference forward has no eval flag (F.dropout defaults
        # to training=True); pass training=False here to disable dropout.
        p = self.dropout if training else 0.0
        packed = fused_mlp_forward(
            z2d, self.packed_w, self.packed_b,
            relu_lo=self.x_dim, relu_hi=self.x_dim + self.max_num_nodes,
            dropout_p=p, seed=seed, row_tile=row_tile)
        mnn = self.max_num_nodes
        out_x = packed[:, :self.x_dim].reshape(lead + (self.x_dim,))
        out_w = packed[:, self.x_dim:self.x_dim + mnn]
        out_m = packed[:, self.x_dim + mnn:self.x_dim + mnn + 2]
        out_w_adj = out_w.reshape(-1, mnn, mnn)
        out_mask = out_m.reshape(lead + (2,))
        return out_x, out_w_adj, out_mask


if __name__ == "__main__":
    # Small, module-consistent shapes.
    batch = 2
    max_num_nodes = 16
    x_dim = 8
    z_dim = 32
    mlp_dims = [32, 64]
    dropout = 0.1

    key = jax.random.PRNGKey(0)
    key_z, key_p = jax.random.split(key)
    z = jax.random.normal(key_z, (batch, max_num_nodes, z_dim), jnp.float32)

    gen = GANGeneratorPallas(max_num_nodes, x_dim, z_dim, mlp_dims,
                             dropout=dropout, key=key_p)
    out_x, out_w_adj, out_mask = gen(z, seed=0)
    jax.block_until_ready((out_x, out_w_adj, out_mask))

    assert out_x.shape == (batch, max_num_nodes, x_dim)
    assert out_w_adj.shape == (batch, max_num_nodes, max_num_nodes)
    assert out_mask.shape == (batch, max_num_nodes, 2)
    assert bool(jnp.all(jnp.isfinite(out_x)))
    assert bool(jnp.all(jnp.isfinite(out_w_adj)))
    assert bool(jnp.all(jnp.isfinite(out_mask)))
    assert bool(jnp.all(out_w_adj >= 0.0))  # w_adj head has final ReLU
    # TODO(synk): dropout mask uses a counter-based hash PRNG, so the random
    # stream cannot bit-match PyTorch's RNG (distribution/scaling identical).
    print("KERNEL_OK")
</pallas_src>

<mosaic_0001>
module attributes {stable_mosaic.version = 11 : i64} {
  func.func @_fused_mlp_kernel(%arg0: i32, %arg1: memref<1xi32, #tpu.memory_space<smem>>, %arg2: memref<16x32xf32, #tpu.memory_space<vmem>>, %arg3: memref<32x128xbf16, #tpu.memory_space<vmem>>, %arg4: memref<1x128xf32, #tpu.memory_space<vmem>>, %arg5: memref<128x256xbf16, #tpu.memory_space<vmem>>, %arg6: memref<1x256xf32, #tpu.memory_space<vmem>>, %arg7: memref<256x128xbf16, #tpu.memory_space<vmem>>, %arg8: memref<1x128xf32, #tpu.memory_space<vmem>>, %arg9: memref<16x128xf32, #tpu.memory_space<vmem>>) attributes {dimension_semantics = [#tpu.dimension_semantics<parallel>], iteration_bounds = array<i64: 2>, scalar_prefetch = 1 : i64, scratch_operands = 0 : i64, tpu.core_type = #tpu.core_type<tc>, window_params = [{transform_indices = @transform_0, window_bounds = array<i64: 16, 32>}, {pipeline_mode = #tpu.pipeline_mode<synchronous>, transform_indices = @transform_1, window_bounds = array<i64: 32, 128>}, {pipeline_mode = #tpu.pipeline_mode<synchronous>, transform_indices = @transform_2, window_bounds = array<i64: 1, 128>}, {pipeline_mode = #tpu.pipeline_mode<synchronous>, transform_indices = @transform_3, window_bounds = array<i64: 128, 256>}, {pipeline_mode = #tpu.pipeline_mode<synchronous>, transform_indices = @transform_4, window_bounds = array<i64: 1, 256>}, {pipeline_mode = #tpu.pipeline_mode<synchronous>, transform_indices = @transform_5, window_bounds = array<i64: 256, 128>}, {pipeline_mode = #tpu.pipeline_mode<synchronous>, transform_indices = @transform_6, window_bounds = array<i64: 1, 128>}, {transform_indices = @transform_7, window_bounds = array<i64: 16, 128>}]} {
    %c0 = arith.constant 0 : index
    %c0_0 = arith.constant 0 : index
    %0 = vector.load %arg2[%c0, %c0_0] : memref<16x32xf32, #tpu.memory_space<vmem>>, vector<16x32xf32>
    %c0_1 = arith.constant 0 : index
    %c0_2 = arith.constant 0 : index
    %1 = vector.load %arg3[%c0_1, %c0_2] : memref<32x128xbf16, #tpu.memory_space<vmem>>, vector<32x128xbf16>
    %c0_3 = arith.constant 0 : index
    %c0_4 = arith.constant 0 : index
    %2 = vector.load %arg4[%c0_3, %c0_4] : memref<1x128xf32, #tpu.memory_space<vmem>>, vector<1x128xf32>
    %3 = arith.truncf %0 : vector<16x32xf32> to vector<16x32xbf16>
    %cst = arith.constant dense<0.000000e+00> : vector<16x128xf32>
    %4 = tpu.matmul %3, %1, %cst {dimension_numbers = #tpu.dot_dimension_numbers<[1], [0], [0], [1], [0, 0, 1, 1], [], []>} : vector<16x32xbf16>, vector<32x128xbf16>, vector<16x128xf32> -> vector<16x128xf32>
    %5 = vector.broadcast %2 : vector<1x128xf32> to vector<16x128xf32>
    %6 = arith.addf %4, %5 : vector<16x128xf32>
    %cst_5 = arith.constant 0.000000e+00 : f32
    %7 = vector.broadcast %cst_5 : f32 to vector<16x128xf32>
    %8 = arith.maximumf %6, %7 : vector<16x128xf32>
    %c0_6 = arith.constant 0 : index
    %c0_7 = arith.constant 0 : index
    %9 = vector.load %arg5[%c0_6, %c0_7] : memref<128x256xbf16, #tpu.memory_space<vmem>>, vector<128x256xbf16>
    %c0_8 = arith.constant 0 : index
    %c0_9 = arith.constant 0 : index
    %10 = vector.load %arg6[%c0_8, %c0_9] : memref<1x256xf32, #tpu.memory_space<vmem>>, vector<1x256xf32>
    %11 = arith.truncf %8 : vector<16x128xf32> to vector<16x128xbf16>
    %cst_10 = arith.constant dense<0.000000e+00> : vector<16x256xf32>
    %12 = tpu.matmul %11, %9, %cst_10 {dimension_numbers = #tpu.dot_dimension_numbers<[1], [0], [0], [1], [0, 0, 1, 1], [], []>} : vector<16x128xbf16>, vector<128x256xbf16>, vector<16x256xf32> -> vector<16x256xf32>
    %13 = vector.broadcast %10 : vector<1x256xf32> to vector<16x256xf32>
    %14 = arith.addf %12, %13 : vector<16x256xf32>
    %cst_11 = arith.constant 0.000000e+00 : f32
    %15 = vector.broadcast %cst_11 : f32 to vector<16x256xf32>
    %16 = arith.maximumf %14, %15 : vector<16x256xf32>
    %c0_12 = arith.constant 0 : index
    %c0_13 = arith.constant 0 : index
    %17 = vector.load %arg7[%c0_12, %c0_13] : memref<256x128xbf16, #tpu.memory_space<vmem>>, vector<256x128xbf16>
    %c0_14 = arith.constant 0 : index
    %c0_15 = arith.constant 0 : index
    %18 = vector.load %arg8[%c0_14, %c0_15] : memref<1x128xf32, #tpu.memory_space<vmem>>, vector<1x128xf32>
    %19 = arith.truncf %16 : vector<16x256xf32> to vector<16x256xbf16>
    %cst_16 = arith.constant dense<0.000000e+00> : vector<16x128xf32>
    %20 = tpu.matmul %19, %17, %cst_16 {dimension_numbers = #tpu.dot_dimension_numbers<[1], [0], [0], [1], [0, 0, 1, 1], [], []>} : vector<16x256xbf16>, vector<256x128xbf16>, vector<16x128xf32> -> vector<16x128xf32>
    %21 = vector.broadcast %18 : vector<1x128xf32> to vector<16x128xf32>
    %22 = arith.addf %20, %21 : vector<16x128xf32>
    %23 = tpu.iota {dimensions = array<i32: 1>} : vector<16x128xi32>
    %c8_i32 = arith.constant 8 : i32
    %24 = vector.broadcast %c8_i32 : i32 to vector<16x128xi32>
    %25 = arith.cmpi sge, %23, %24 : vector<16x128xi32>
    %c24_i32 = arith.constant 24 : i32
    %26 = vector.broadcast %c24_i32 : i32 to vector<16x128xi32>
    %27 = arith.cmpi slt, %23, %26 : vector<16x128xi32>
    %28 = arith.andi %25, %27 : vector<16x128xi1>
    %cst_17 = arith.constant 0.000000e+00 : f32
    %29 = vector.broadcast %cst_17 : f32 to vector<16x128xf32>
    %30 = arith.maximumf %22, %29 : vector<16x128xf32>
    %31 = arith.select %28, %30, %22 : vector<16x128xi1>, vector<16x128xf32>
    %c16_i32 = arith.constant 16 : i32
    %32 = arith.muli %arg0, %c16_i32 : i32
    %33 = tpu.iota {dimensions = array<i32: 0>} : vector<16x128xi32>
    %34 = vector.broadcast %32 : i32 to vector<16x128xi32>
    %35 = arith.addi %33, %34 : vector<16x128xi32>
    %c128_i32 = arith.constant 128 : i32
    %36 = vector.broadcast %c128_i32 : i32 to vector<16x128xi32>
    %37 = arith.muli %35, %36 : vector<16x128xi32>
    %38 = arith.addi %37, %23 : vector<16x128xi32>
    %c0_18 = arith.constant 0 : index
    %39 = memref.load %arg1[%c0_18] : memref<1xi32, #tpu.memory_space<smem>>
    %c-1640531535_i32 = arith.constant -1640531535 : i32
    %40 = arith.muli %39, %c-1640531535_i32 : i32
    %c-2048144789_i32 = arith.constant -2048144789 : i32
    %41 = arith.addi %40, %c-2048144789_i32 : i32
    %42 = vector.broadcast %41 : i32 to vector<16x128xi32>
    %43 = arith.xori %38, %42 : vector<16x128xi32>
    %c16_i32_19 = arith.constant 16 : i32
    %44 = vector.broadcast %c16_i32_19 : i32 to vector<16x128xi32>
    %45 = arith.shrui %43, %44 : vector<16x128xi32>
    %46 = arith.xori %43, %45 : vector<16x128xi32>
    %c2146121005_i32 = arith.constant 2146121005 : i32
    %47 = vector.broadcast %c2146121005_i32 : i32 to vector<16x128xi32>
    %48 = arith.muli %46, %47 : vector<16x128xi32>
    %c15_i32 = arith.constant 15 : i32
    %49 = vector.broadcast %c15_i32 : i32 to vector<16x128xi32>
    %50 = arith.shrui %48, %49 : vector<16x128xi32>
    %51 = arith.xori %48, %50 : vector<16x128xi32>
    %c-2073254261_i32 = arith.constant -2073254261 : i32
    %52 = vector.broadcast %c-2073254261_i32 : i32 to vector<16x128xi32>
    %53 = arith.muli %51, %52 : vector<16x128xi32>
    %c16_i32_20 = arith.constant 16 : i32
    %54 = vector.broadcast %c16_i32_20 : i32 to vector<16x128xi32>
    %55 = arith.shrui %53, %54 : vector<16x128xi32>
    %56 = arith.xori %53, %55 : vector<16x128xi32>
    %c-429496730_i32 = arith.constant -429496730 : i32
    %57 = vector.broadcast %c-429496730_i32 : i32 to vector<16x128xi32>
    %58 = arith.cmpi ult, %56, %57 : vector<16x128xi32>
    %cst_21 = arith.constant 1.11111116 : f32
    %59 = vector.broadcast %cst_21 : f32 to vector<16x128xf32>
    %60 = arith.mulf %31, %59 : vector<16x128xf32>
    %cst_22 = arith.constant 0.000000e+00 : f32
    %61 = vector.broadcast %cst_22 : f32 to vector<16x128xf32>
    %62 = arith.select %58, %60, %61 : vector<16x128xi1>, vector<16x128xf32>
    %c0_23 = arith.constant 0 : index
    %c0_24 = arith.constant 0 : index
    %63 = vector.load %arg9[%c0_23, %c0_24] : memref<16x128xf32, #tpu.memory_space<vmem>>, vector<16x128xf32>
    tpu.vector_store %arg9[%c0_23, %c0_24], %62 {strides = array<i32>} : memref<16x128xf32, #tpu.memory_space<vmem>>, vector<16x128xf32>,
    return
  }
  func.func @transform_0(%arg0: i32, %arg1: memref<1xi32, #tpu.memory_space<smem>>) -> (i32, i32) {
    %c0_i32 = arith.constant 0 : i32
    %c0_i32_0 = arith.constant 0 : i32
    return %arg0, %c0_i32 : i32, i32
  }
  func.func @transform_1(%arg0: i32, %arg1: memref<1xi32, #tpu.memory_space<smem>>) -> (i32, i32) {
    %c0_i32 = arith.constant 0 : i32
    %c0_i32_0 = arith.constant 0 : i32
    %c0_i32_1 = arith.constant 0 : i32
    return %c0_i32, %c0_i32_0 : i32, i32
  }
  func.func @transform_2(%arg0: i32, %arg1: memref<1xi32, #tpu.memory_space<smem>>) -> (i32, i32) {
    %c0_i32 = arith.constant 0 : i32
    %c0_i32_0 = arith.constant 0 : i32
    %c0_i32_1 = arith.constant 0 : i32
    return %c0_i32, %c0_i32_0 : i32, i32
  }
  func.func @transform_3(%arg0: i32, %arg1: memref<1xi32, #tpu.memory_space<smem>>) -> (i32, i32) {
    %c0_i32 = arith.constant 0 : i32
    %c0_i32_0 = arith.constant 0 : i32
    %c0_i32_1 = arith.constant 0 : i32
    return %c0_i32, %c0_i32_0 : i32, i32
  }
  func.func @transform_4(%arg0: i32, %arg1: memref<1xi32, #tpu.memory_space<smem>>) -> (i32, i32) {
    %c0_i32 = arith.constant 0 : i32
    %c0_i32_0 = arith.constant 0 : i32
    %c0_i32_1 = arith.constant 0 : i32
    return %c0_i32, %c0_i32_0 : i32, i32
  }
  func.func @transform_5(%arg0: i32, %arg1: memref<1xi32, #tpu.memory_space<smem>>) -> (i32, i32) {
    %c0_i32 = arith.constant 0 : i32
    %c0_i32_0 = arith.constant 0 : i32
    %c0_i32_1 = arith.constant 0 : i32
    return %c0_i32, %c0_i32_0 : i32, i32
  }
  func.func @transform_6(%arg0: i32, %arg1: memref<1xi32, #tpu.memory_space<smem>>) -> (i32, i32) {
    %c0_i32 = arith.constant 0 : i32
    %c0_i32_0 = arith.constant 0 : i32
    %c0_i32_1 = arith.constant 0 : i32
    return %c0_i32, %c0_i32_0 : i32, i32
  }
  func.func @transform_7(%arg0: i32, %arg1: memref<1xi32, #tpu.memory_space<smem>>) -> (i32, i32) {
    %c0_i32 = arith.constant 0 : i32
    %c0_i32_0 = arith.constant 0 : i32
    return %arg0, %c0_i32 : i32, i32
  }
}

</mosaic_0001>

<llo_original>
// kernel: tpu_custom_call.1
$region0: #{tpu_custom_call.1}
  #allocation0 [shape = 'u32[]', space=smem, size = 0x4, offset = 0x4, fixed_abs, tag = 'smem constant byte address 0x4 - core index']
  #allocation1 [shape = 'u32[72,128]{1,0:T(1,128)}', space=vmem, size = 0x9000, scoped, tag = 'internal scratch']
  #allocation2 [shape = 's32[1]{0}', space=sflag, size = 0x4, scoped, tag = 'scoped memory for tpu_custom_call.1']
  #allocation3 [shape = 's32[1]{0:T(128)S(6)}', space=smem, size = 0x200, scoped, tag = 'prefetched SMEM operand 0']
  %s0 = inlined_call_operand.<no memory space> [shape: s32[1], index: 0, kind: input, shape index: {}]
  %s1 = inlined_call_operand.hbm [shape: f32[32,32], index: 1, kind: input, shape index: {}]
  %s2 = inlined_call_operand.hbm [shape: bf16[32,128], index: 2, kind: input, shape index: {}]
  %s3 = inlined_call_operand.vmem [shape: f32[1,128], index: 3, kind: input, shape index: {}]
  %s4 = inlined_call_operand.hbm [shape: bf16[128,256], index: 4, kind: input, shape index: {}]
  %s5 = inlined_call_operand.vmem [shape: f32[1,256], index: 5, kind: input, shape index: {}]
  %s6 = inlined_call_operand.hbm [shape: bf16[256,128], index: 6, kind: input, shape index: {}]
  %s7 = inlined_call_operand.vmem [shape: f32[1,128], index: 7, kind: input, shape index: {}]
  %s8 = inlined_call_operand.hbm [shape: f32[32,128], index: 8, kind: output, shape index: {}]
  %s9 = sld [smem:[#allocation0]]
  $region77: #{tpu_custom_call.1} parent=0
    _
  %s11 = ssub.s32 1, %s9
  %s12 = scalar_select 0, %s11, %s9
  %13 = sst [smem:[#allocation3]] %s0
  $region1: #{tpu_custom_call.1} parent=0
    #allocation4 [shape = 'u8[16384]{0}', space=vmem, size = 0x4000, scoped, tag = 'input window, operand 1']
    #allocation5 [shape = 's32[2]{0}', space=sflag, size = 0x8, scoped, tag = 'scoped memory for tpu_custom_call.1']
    #allocation6 [shape = 's32[2]{0}', space=sflag, size = 0x8, scoped, tag = 'scoped memory for tpu_custom_call.1']
    #allocation7 [shape = 'u8[8192]{0}', space=vmem, size = 0x2000, scoped, tag = 'input window, operand 2, single buffered']
    #allocation8 [shape = 's32[1]{0}', space=sflag, size = 0x4, scoped, tag = 'scoped memory for tpu_custom_call.1']
    #allocation9 [shape = 'u8[65536]{0}', space=vmem, size = 0x10000, scoped, tag = 'input window, operand 4, single buffered']
    #allocation10 [shape = 'u8[65536]{0}', space=vmem, size = 0x10000, scoped, tag = 'input window, operand 6, single buffered']
    #allocation11 [shape = 's32[1]{0}', space=sflag, size = 0x4, scoped, tag = 'scoped memory for tpu_custom_call.1']
    #allocation12 [shape = 'u8[16384]{0}', space=vmem, size = 0x4000, scoped, tag = 'output window, operand 0']
    %14 = vsyncpa [#allocation5], 0
    %s15 = scalar_lea.sflag [#allocation5], 1
    %16 = vsyncpa %s15, 0
    %17 = vsyncpa [#allocation8], 0
    %18 = vsyncpa [#allocation11], 0
    %19 = vsyncpa [#allocation6], 0
    %s20 = scalar_lea.sflag [#allocation6], 1
    %21 = vsyncpa %s20, 0
    loop: start=0, step=1, limit=4
    $region2: #{tpu_custom_call.1} parent=1 // loop_pre_header
      _
    $region3: #{tpu_custom_call.1} parent=1 // loop_header
      %s23 = sphi 0, %s27
      %p24 = scmp.ge.s32.totalorder %s23, 4
      %s33 = sphi 0, %s35
      %s36 = sphi 0, %s33
      %s37 = sphi 0, %s36
      %s53 = sphi 0, %s37
      %s57 = sphi 0, %s57
      %s59 = sphi 0, %s57
      %s60 = sphi 0, %s59
      %s74 = sphi 0, %s60
      %s78 = sphi 0, %s78
      %s80 = sphi 0, %s78
      %s81 = sphi 0, %s80
      %s95 = sphi 0, %s81
      %s99 = sphi 0, %s99
      %s101 = sphi 0, %s99
      %s102 = sphi 0, %s101
      %s116 = sphi 0, %s102
      %s120 = sphi 0, %s120
      %s122 = sphi 0, %s120
      %s123 = sphi 0, %s122
      %s137 = sphi 0, %s123
      %s141 = sphi 0, %s141
      %s143 = sphi 0, %s141
      %s144 = sphi 0, %s143
      %s158 = sphi 0, %s144
      %s162 = sphi 0, %s162
      %s164 = sphi 0, %s162
      %s165 = sphi 0, %s164
      %s179 = sphi 0, %s165
      %s185 = sphi 0, %s187
      %s188 = sphi 0, %s185
      %s189 = sphi 0, %s188
      %s205 = sphi 0, %s189
    $region4: #{tpu_custom_call.1} parent=1 // loop_header_branch
      %26 = sbr.rel (%p24) target = $region8
    $region5: #{tpu_custom_call.1} parent=1 // loop_body
      %s28 = ssub.s32 %s23, 1
      %s29 = ssub.s32 %s23, 2
      %s30 = sadd.s32 %s23, 1
      %s31 = ssub.s32 %s23, %s30
      %p32 = scmp.eq.s32.totalorder %s31, 0
      %s34 = sadd.s32 %s33, 1
      %s35 = scalar_select %p32, %s33, %s34
      %p38 = pneg %p32
      %p39 = scmp.eq.s32.totalorder %s23, 1
      %p40 = por %p38, %p39
      %p41 = scmp.ne.s32.totalorder %s33, %s36
      %p42 = scmp.eq.s32.totalorder %s23, 0
      %p43 = por %p41, %p42
      %p44 = scmp.ne.s32.totalorder %s33, %s36
      %p45 = scmp.eq.s32.totalorder %s28, 1
      %p46 = por %p44, %p45
      %p47 = scmp.ne.s32.totalorder %s36, %s37
      %p48 = scmp.eq.s32.totalorder %s28, 0
      %p49 = por %p47, %p48
      %p50 = scmp.ne.s32.totalorder %s36, %s37
      %p51 = scmp.eq.s32.totalorder %s29, 1
      %p52 = por %p50, %p51
      %p54 = scmp.ne.s32.totalorder %s37, %s53
      %p55 = scmp.eq.s32.totalorder %s29, 0
      %p56 = por %p54, %p55
      %s58 = sadd.s32 %s57, 1
      %p61 = scmp.eq.s32.totalorder %s23, 1
      %p62 = scmp.ne.s32.totalorder %s57, %s59
      %p63 = scmp.eq.s32.totalorder %s23, 0
      %p64 = por %p62, %p63
      %p65 = scmp.ne.s32.totalorder %s57, %s59
      %p66 = scmp.eq.s32.totalorder %s28, 1
      %p67 = por %p65, %p66
      %p68 = scmp.ne.s32.totalorder %s59, %s60
      %p69 = scmp.eq.s32.totalorder %s28, 0
      %p70 = por %p68, %p69
      %p71 = scmp.ne.s32.totalorder %s59, %s60
      %p72 = scmp.eq.s32.totalorder %s29, 1
      %p73 = por %p71, %p72
      %p75 = scmp.ne.s32.totalorder %s60, %s74
      %p76 = scmp.eq.s32.totalorder %s29, 0
      %p77 = por %p75, %p76
      %s79 = sadd.s32 %s78, 1
      %p82 = scmp.eq.s32.totalorder %s23, 1
      %p83 = scmp.ne.s32.totalorder %s78, %s80
      %p84 = scmp.eq.s32.totalorder %s23, 0
      %p85 = por %p83, %p84
      %p86 = scmp.ne.s32.totalorder %s78, %s80
      %p87 = scmp.eq.s32.totalorder %s28, 1
      %p88 = por %p86, %p87
      %p89 = scmp.ne.s32.totalorder %s80, %s81
      %p90 = scmp.eq.s32.totalorder %s28, 0
      %p91 = por %p89, %p90
      %p92 = scmp.ne.s32.totalorder %s80, %s81
      %p93 = scmp.eq.s32.totalorder %s29, 1
      %p94 = por %p92, %p93
      %p96 = scmp.ne.s32.totalorder %s81, %s95
      %p97 = scmp.eq.s32.totalorder %s29, 0
      %p98 = por %p96, %p97
      %s100 = sadd.s32 %s99, 1
      %p103 = scmp.eq.s32.totalorder %s23, 1
      %p104 = scmp.ne.s32.totalorder %s99, %s101
      %p105 = scmp.eq.s32.totalorder %s23, 0
      %p106 = por %p104, %p105
      %p107 = scmp.ne.s32.totalorder %s99, %s101
      %p108 = scmp.eq.s32.totalorder %s28, 1
      %p109 = por %p107, %p108
      %p110 = scmp.ne.s32.totalorder %s101, %s102
      %p111 = scmp.eq.s32.totalorder %s28, 0
      %p112 = por %p110, %p111
      %p113 = scmp.ne.s32.totalorder %s101, %s102
      %p114 = scmp.eq.s32.totalorder %s29, 1
      %p115 = por %p113, %p114
      %p117 = scmp.ne.s32.totalorder %s102, %s116
      %p118 = scmp.eq.s32.totalorder %s29, 0
      %p119 = por %p117, %p118
      %s121 = sadd.s32 %s120, 1
      %p124 = scmp.eq.s32.totalorder %s23, 1
      %p125 = scmp.ne.s32.totalorder %s120, %s122
      %p126 = scmp.eq.s32.totalorder %s23, 0
      %p127 = por %p125, %p126
      %p128 = scmp.ne.s32.totalorder %s120, %s122
      %p129 = scmp.eq.s32.totalorder %s28, 1
      %p130 = por %p128, %p129
      %p131 = scmp.ne.s32.totalorder %s122, %s123
      %p132 = scmp.eq.s32.totalorder %s28, 0
      %p133 = por %p131, %p132
      %p134 = scmp.ne.s32.totalorder %s122, %s123
      %p135 = scmp.eq.s32.totalorder %s29, 1
      %p136 = por %p134, %p135
      %p138 = scmp.ne.s32.totalorder %s123, %s137
      %p139 = scmp.eq.s32.totalorder %s29, 0
      %p140 = por %p138, %p139
      %s142 = sadd.s32 %s141, 1
      %p145 = scmp.eq.s32.totalorder %s23, 1
      %p146 = scmp.ne.s32.totalorder %s141, %s143
      %p147 = scmp.eq.s32.totalorder %s23, 0
      %p148 = por %p146, %p147
      %p149 = scmp.ne.s32.totalorder %s141, %s143
      %p150 = scmp.eq.s32.totalorder %s28, 1
      %p151 = por %p149, %p150
      %p152 = scmp.ne.s32.totalorder %s143, %s144
      %p153 = scmp.eq.s32.totalorder %s28, 0
      %p154 = por %p152, %p153
      %p155 = scmp.ne.s32.totalorder %s143, %s144
      %p156 = scmp.eq.s32.totalorder %s29, 1
      %p157 = por %p155, %p156
      %p159 = scmp.ne.s32.totalorder %s144, %s158
      %p160 = scmp.eq.s32.totalorder %s29, 0
      %p161 = por %p159, %p160
      %s163 = sadd.s32 %s162, 1
      %p166 = scmp.eq.s32.totalorder %s23, 1
      %p167 = scmp.ne.s32.totalorder %s162, %s164
      %p168 = scmp.eq.s32.totalorder %s23, 0
      %p169 = por %p167, %p168
      %p170 = scmp.ne.s32.totalorder %s162, %s164
      %p171 = scmp.eq.s32.totalorder %s28, 1
      %p172 = por %p170, %p171
      %p173 = scmp.ne.s32.totalorder %s164, %s165
      %p174 = scmp.eq.s32.totalorder %s28, 0
      %p175 = por %p173, %p174
      %p176 = scmp.ne.s32.totalorder %s164, %s165
      %p177 = scmp.eq.s32.totalorder %s29, 1
      %p178 = por %p176, %p177
      %p180 = scmp.ne.s32.totalorder %s165, %s179
      %p181 = scmp.eq.s32.totalorder %s29, 0
      %p182 = por %p180, %p181
      %s183 = ssub.s32 %s23, %s30
      %p184 = scmp.eq.s32.totalorder %s183, 0
      %s186 = sadd.s32 %s185, 1
      %s187 = scalar_select %p184, %s185, %s186
      %p190 = pneg %p184
      %p191 = scmp.eq.s32.totalorder %s23, 1
      %p192 = por %p190, %p191
      %p193 = scmp.ne.s32.totalorder %s185, %s188
      %p194 = scmp.eq.s32.totalorder %s23, 0
      %p195 = por %p193, %p194
      %p196 = scmp.ne.s32.totalorder %s185, %s188
      %p197 = scmp.eq.s32.totalorder %s28, 1
      %p198 = por %p196, %p197
      %p199 = scmp.ne.s32.totalorder %s188, %s189
      %p200 = scmp.eq.s32.totalorder %s28, 0
      %p201 = por %p199, %p200
      %p202 = scmp.ne.s32.totalorder %s188, %s189
      %p203 = scmp.eq.s32.totalorder %s29, 1
      %p204 = por %p202, %p203
      %p206 = scmp.ne.s32.totalorder %s189, %s205
      %p207 = scmp.eq.s32.totalorder %s29, 0
      %p208 = por %p206, %p207
      %p209 = scmp.le.s32.totalorder 1, %s23
      %p210 = scmp.lt.s32.totalorder %s23, 3
      %p211 = pnand %p209, %p210
      %p212 = pneg %p211
      // Predicated region
      $region9: #{tpu_custom_call.1} parent=5 // pred_check
        _
      $region10: #{tpu_custom_call.1} parent=5 // pred_check_branch
        %214 = sbr.rel (%p211) target = $region12
      $region11: #{tpu_custom_call.1} parent=5 // pred_region
        %s215 = ssub.s32 %s23, 1
        // Predicated region
        $region13: #{tpu_custom_call.1} parent=11 // pred_check
          %p216 = pneg %p70
        $region14: #{tpu_custom_call.1} parent=11 // pred_check_branch
          %218 = sbr.rel (%p216) target = $region16
        $region15: #{tpu_custom_call.1} parent=11 // pred_region
          %220 = vsyncadd [#allocation8], 0
          %s221 = sshll.u32 %s2, 4
          %s222 = int_to_ptr.hbm [resolvable:$true] %s221
          %s223 = sshll.u32 [#allocation7], 4
          %s224 = int_to_ptr.vmem [resolvable:$true] %s223
          %229 = dma.hbm_to_vmem [thread:$0]  %s222, 256, %s224, [#allocation8], 64, 64, 4
        $region16: #{tpu_custom_call.1} parent=11 // pred_fallthru
          _
        // Predicated region
        $region17: #{tpu_custom_call.1} parent=11 // pred_check
          %p230 = pneg %p91
        $region18: #{tpu_custom_call.1} parent=11 // pred_check_branch
          %232 = sbr.rel (%p230) target = $region20
        $region19: #{tpu_custom_call.1} parent=11 // pred_region
          _
        $region20: #{tpu_custom_call.1} parent=11 // pred_fallthru
          _
        // Predicated region
        $region21: #{tpu_custom_call.1} parent=11 // pred_check
          %p233 = pneg %p112
        $region22: #{tpu_custom_call.1} parent=11 // pred_check_branch
          %235 = sbr.rel (%p233) target = $region24
        $region23: #{tpu_custom_call.1} parent=11 // pred_region
          %237 = vsyncadd [#allocation8], 0
          %s238 = sshll.u32 %s4, 4
          %s239 = int_to_ptr.hbm [resolvable:$true] %s238
          %s240 = sshll.u32 [#allocation9], 4
          %s241 = int_to_ptr.vmem [resolvable:$true] %s240
          %246 = dma.hbm_to_vmem [thread:$0]  %s239, 2048, %s241, [#allocation8], 128, 128, 8
        $region24: #{tpu_custom_call.1} parent=11 // pred_fallthru
          _
        // Predicated region
        $region25: #{tpu_custom_call.1} parent=11 // pred_check
          %p247 = pneg %p133
        $region26: #{tpu_custom_call.1} parent=11 // pred_check_branch
          %249 = sbr.rel (%p247) target = $region28
        $region27: #{tpu_custom_call.1} parent=11 // pred_region
          _
        $region28: #{tpu_custom_call.1} parent=11 // pred_fallthru
          _
        // Predicated region
        $region29: #{tpu_custom_call.1} parent=11 // pred_check
          %p250 = pneg %p154
        $region30: #{tpu_custom_call.1} parent=11 // pred_check_branch
          %252 = sbr.rel (%p250) target = $region32
        $region31: #{tpu_custom_call.1} parent=11 // pred_region
          %254 = vsyncadd [#allocation11], 0
          %s255 = sshll.u32 %s6, 4
          %s256 = int_to_ptr.hbm [resolvable:$true] %s255
          %s257 = sshll.u32 [#allocation10], 4
          %s258 = int_to_ptr.vmem [resolvable:$true] %s257
          %263 = dma.hbm_to_vmem [thread:$0]  %s256, 2048, %s258, [#allocation11], 64, 64, 4
        $region32: #{tpu_custom_call.1} parent=11 // pred_fallthru
          _
        // Predicated region
        $region33: #{tpu_custom_call.1} parent=11 // pred_check
          %p264 = pneg %p175
        $region34: #{tpu_custom_call.1} parent=11 // pred_check_branch
          %266 = sbr.rel (%p264) target = $region36
        $region35: #{tpu_custom_call.1} parent=11 // pred_region
          _
        $region36: #{tpu_custom_call.1} parent=11 // pred_fallthru
          _
      $region12: #{tpu_custom_call.1} parent=5 // pred_fallthru
        _
      %p267 = scmp.lt.s32.totalorder %s23, 2
      // Predicated region
      $region37: #{tpu_custom_call.1} parent=5 // pred_check
        %p268 = pneg %p267
      $region38: #{tpu_custom_call.1} parent=5 // pred_check_branch
        %270 = sbr.rel (%p268) target = $region40
      $region39: #{tpu_custom_call.1} parent=5 // pred_region
        // Predicated region
        $region41: #{tpu_custom_call.1} parent=39 // pred_check
          %p271 = pneg %p43
        $region42: #{tpu_custom_call.1} parent=39 // pred_check_branch
          %273 = sbr.rel (%p271) target = $region44
        $region43: #{tpu_custom_call.1} parent=39 // pred_region
          %s274 = sand.u32 %s33, 1
          %s275 = scalar_lea.sflag [#allocation5], %s274
          %s276 = sand.u32 %s33, 1
          %s277 = smul.addr %s276, 16
          %s278 = scalar_lea.vmem [#allocation4], %s277
          %s279 = smul.u32 2, %s23
          %281 = vsyncadd %s275, 0
          %s282 = smul.addr %s279, 8
          %s283 = scalar_lea.hbm %s1, %s282
          %s284 = sshll.u32 %s283, 4
          %s285 = int_to_ptr.hbm [resolvable:$true] %s284
          %s286 = sshll.u32 %s278, 4
          %s287 = int_to_ptr.vmem [resolvable:$true] %s286
          %292 = dma.hbm_to_vmem [thread:$0]  %s285, 256, %s287, %s275, 128, 128, 8
        $region44: #{tpu_custom_call.1} parent=39 // pred_fallthru
          _
      $region40: #{tpu_custom_call.1} parent=5 // pred_fallthru
        _
      %p293 = scmp.le.s32.totalorder 1, %s23
      %p294 = scmp.lt.s32.totalorder %s23, 3
      %p295 = pnand %p293, %p294
      %p296 = pneg %p295
      // Predicated region
      $region45: #{tpu_custom_call.1} parent=5 // pred_check
        _
      $region46: #{tpu_custom_call.1} parent=5 // pred_check_branch
        %298 = sbr.rel (%p295) target = $region48
      $region47: #{tpu_custom_call.1} parent=5 // pred_region
        %s299 = ssub.s32 %s23, 1
        %s300 = sand.u32 %s36, 1
        %s301 = scalar_lea.sflag [#allocation5], %s300
        %s302 = sand.u32 %s36, 1
        %s303 = smul.addr %s302, 16
        %s304 = scalar_lea.vmem [#allocation4], %s303
        // Predicated region
        $region49: #{tpu_custom_call.1} parent=47 // pred_check
          %p305 = pneg %p49
        $region50: #{tpu_custom_call.1} parent=47 // pred_check_branch
          %307 = sbr.rel (%p305) target = $region52
        $region51: #{tpu_custom_call.1} parent=47 // pred_region
          %309 = dma.done %s301, 256
        $region52: #{tpu_custom_call.1} parent=47 // pred_fallthru
          _
        // Predicated region
        $region53: #{tpu_custom_call.1} parent=47 // pred_check
          %p310 = pneg %p70
        $region54: #{tpu_custom_call.1} parent=47 // pred_check_branch
          %312 = sbr.rel (%p310) target = $region56
        $region55: #{tpu_custom_call.1} parent=47 // pred_region
          %314 = dma.done [#allocation8], 256
        $region56: #{tpu_custom_call.1} parent=47 // pred_fallthru
          _
        // Predicated region
        $region57: #{tpu_custom_call.1} parent=47 // pred_check
          %p315 = pneg %p112
        $region58: #{tpu_custom_call.1} parent=47 // pred_check_branch
          %317 = sbr.rel (%p315) target = $region60
        $region59: #{tpu_custom_call.1} parent=47 // pred_region
          %319 = dma.done [#allocation8], 2048
        $region60: #{tpu_custom_call.1} parent=47 // pred_fallthru
          _
        // Predicated region
        $region61: #{tpu_custom_call.1} parent=47 // pred_check
          %p320 = pneg %p154
        $region62: #{tpu_custom_call.1} parent=47 // pred_check_branch
          %322 = sbr.rel (%p320) target = $region64
        $region63: #{tpu_custom_call.1} parent=47 // pred_region
          %324 = dma.done [#allocation11], 2048
        $region64: #{tpu_custom_call.1} parent=47 // pred_fallthru
          _
        %s325 = sand.u32 %s36, 1
        %s326 = scalar_lea.sflag [#allocation5], %s325
        %s327 = sand.u32 %s36, 1
        %s328 = smul.addr %s327, 16
        %s329 = scalar_lea.vmem [#allocation4], %s328
        %p330 = pneg %p49
        %p331 = pneg %p46
        %p332 = pneg %p70
        %p333 = pneg %p67
        %p334 = pneg %p91
        %p335 = pneg %p88
        %p336 = pneg %p112
        %p337 = pneg %p109
        %p338 = pneg %p133
        %p339 = pneg %p130
        %p340 = pneg %p154
        %p341 = pneg %p151
        %p342 = pneg %p175
        %p343 = pneg %p172
        %p344 = pneg %p201
        %p345 = pneg %p198
        %s346 = sand.u32 %s188, 1
        %s347 = scalar_lea.sflag [#allocation6], %s346
        %s348 = sand.u32 %s188, 1
        %s349 = smul.addr %s348, 16
        %s350 = scalar_lea.vmem [#allocation12], %s349
        %s351 = smul.u32 2, %s28
        %s352 = smul.u32 2, %s28
        %v354 = vld [vmem:[%s304] sm:$0xff]
        %v355 = vld [vmem:[%s304 + $0x8] sm:$0xff]
        %v356 = vld [vmem:[#allocation7] sm:$0xf]
        %v357 = vld [vmem:[#allocation7 + $0x4] sm:$0xf]
        %v358 = vld [vmem:[#allocation7 + $0x8] sm:$0xf]
        %v359 = vld [vmem:[#allocation7 + $0xc] sm:$0xf]
        %v360 = vld [vmem:[%s3] sm:$0x1]
        %v361 = vpack.c.bf16 %v355, %v354
        %v363 = vperm.slane %v360, 0
        %v369 = vunpack.c.l.b16 %v356
        %v370 = vunpack.c.l.b16 %v357
        %v371 = vunpack.c.l.b16 %v358
        %v372 = vunpack.c.l.b16 %v359
        %v373 = vpack.c.b16 %v370, %v369
        %v374 = vpack.c.b16 %v372, %v371
        %vm377 = vcmask 261120
        %v379 = vsel %vm377, %v361, 0
        %381 = vmatpush.bf16.msra.mxu0 0
        %382 = vmatpush.bf16.msra.mxu0 0
        %383 = vmatpush.bf16.msra.mxu0 0
        %384 = vmatpush.bf16.msra.mxu0 0
        %385 = vmatpush.bf16.msra.mxu0 0
        %386 = vmatpush.bf16.msra.mxu0 0
        %387 = vmatpush.bf16.msra.mxu0 %v374
        %388 = vmatpush.bf16.msra.mxu0 %v373
        %389 = vmatmul.bf16.gmra.mxu0 %v379
        %v390 = vpop.f32.mrf.mxu0
        %v391 = vadd.f32 %v363, %v390
        %v392 = vpop.f32.mrf.mxu0
        %v393 = vadd.f32 %v363, %v392
        %394 = vdwg.mxu0
        %v395 = vmax.f32 %v391, 0.0
        %v396 = vmax.f32 %v393, 0.0
        %v397 = vld [vmem:[#allocation9] sm:$0xff]
        %v398 = vld [vmem:[#allocation9 + $0x8] sm:$0xff]
        %v399 = vld [vmem:[#allocation9 + $0x10] sm:$0xff]
        %v400 = vld [vmem:[#allocation9 + $0x18] sm:$0xff]
        %v401 = vld [vmem:[#allocation9 + $0x20] sm:$0xff]
        %v402 = vld [vmem:[#allocation9 + $0x28] sm:$0xff]
        %v403 = vld [vmem:[#allocation9 + $0x30] sm:$0xff]
        %v404 = vld [vmem:[#allocation9 + $0x38] sm:$0xff]
        %v405 = vld [vmem:[#allocation9 + $0x40] sm:$0xff]
        %v406 = vld [vmem:[#allocation9 + $0x48] sm:$0xff]
        %v407 = vld [vmem:[#allocation9 + $0x50] sm:$0xff]
        %v408 = vld [vmem:[#allocation9 + $0x58] sm:$0xff]
        %v409 = vld [vmem:[#allocation9 + $0x60] sm:$0xff]
        %v410 = vld [vmem:[#allocation9 + $0x68] sm:$0xff]
        %v411 = vld [vmem:[#allocation9 + $0x70] sm:$0xff]
        %v412 = vld [vmem:[#allocation9 + $0x78] sm:$0xff]
        %v413 = vld [vmem:[%s5] sm:$0x3]
        %v414 = vpack.c.bf16 %v396, %v395
        %v416 = vperm.slane %v413, 0
        %v417 = vperm.slane %v413, 1
        %v436 = vunpack.c.l.b16 %v397
        %v437 = vunpack.c.h.b16 %v397
        %v438 = vunpack.c.l.b16 %v398
        %v439 = vunpack.c.h.b16 %v398
        %v440 = vunpack.c.l.b16 %v399
        %v441 = vunpack.c.h.b16 %v399
        %v442 = vunpack.c.l.b16 %v400
        %v443 = vunpack.c.h.b16 %v400
        %v444 = vunpack.c.l.b16 %v401
        %v445 = vunpack.c.h.b16 %v401
        %v446 = vunpack.c.l.b16 %v402
        %v447 = vunpack.c.h.b16 %v402
        %v448 = vunpack.c.l.b16 %v403
        %v449 = vunpack.c.h.b16 %v403
        %v450 = vunpack.c.l.b16 %v404
        %v451 = vunpack.c.h.b16 %v404
        %v452 = vunpack.c.l.b16 %v405
        %v453 = vunpack.c.h.b16 %v405
        %v454 = vunpack.c.l.b16 %v406
        %v455 = vunpack.c.h.b16 %v406
        %v456 = vunpack.c.l.b16 %v407
        %v457 = vunpack.c.h.b16 %v407
        %v458 = vunpack.c.l.b16 %v408
        %v459 = vunpack.c.h.b16 %v408
        %v460 = vunpack.c.l.b16 %v409
        %v461 = vunpack.c.h.b16 %v409
        %v462 = vunpack.c.l.b16 %v410
        %v463 = vunpack.c.h.b16 %v410
        %v464 = vunpack.c.l.b16 %v411
        %v465 = vunpack.c.h.b16 %v411
        %v466 = vunpack.c.l.b16 %v412
        %v467 = vunpack.c.h.b16 %v412
        %v468 = vpack.c.b16 %v438, %v436
        %v469 = vpack.c.b16 %v439, %v437
        %v470 = vpack.c.b16 %v442, %v440
        %v471 = vpack.c.b16 %v443, %v441
        %v472 = vpack.c.b16 %v446, %v444
        %v473 = vpack.c.b16 %v447, %v445
        %v474 = vpack.c.b16 %v450, %v448
        %v475 = vpack.c.b16 %v451, %v449
        %v476 = vpack.c.b16 %v454, %v452
        %v477 = vpack.c.b16 %v455, %v453
        %v478 = vpack.c.b16 %v458, %v456
        %v479 = vpack.c.b16 %v459, %v457
        %v480 = vpack.c.b16 %v462, %v460
        %v481 = vpack.c.b16 %v463, %v461
        %v482 = vpack.c.b16 %v466, %v464
        %v483 = vpack.c.b16 %v467, %v465
        %500 = vmatpush.bf16.msra.mxu0 %v482
        %501 = vmatpush.bf16.msra.mxu0 %v480
        %502 = vmatpush.bf16.msra.mxu0 %v478
        %503 = vmatpush.bf16.msra.mxu0 %v476
        %504 = vmatpush.bf16.msra.mxu0 %v474
        %505 = vmatpush.bf16.msra.mxu0 %v472
        %506 = vmatpush.bf16.msra.mxu0 %v470
        %507 = vmatpush.bf16.msra.mxu0 %v468
        %508 = vmatmul.bf16.gmra.mxu0 %v414
        %v509 = vpop.f32.mrf.mxu0
        %v510 = vadd.f32 %v416, %v509
        %v511 = vpop.f32.mrf.mxu0
        %v512 = vadd.f32 %v416, %v511
        %513 = vdwg.mxu0
        %514 = vmatpush.bf16.msra.mxu0 %v483
        %515 = vmatpush.bf16.msra.mxu0 %v481
        %516 = vmatpush.bf16.msra.mxu0 %v479
        %517 = vmatpush.bf16.msra.mxu0 %v477
        %518 = vmatpush.bf16.msra.mxu0 %v475
        %519 = vmatpush.bf16.msra.mxu0 %v473
        %520 = vmatpush.bf16.msra.mxu0 %v471
        %521 = vmatpush.bf16.msra.mxu0 %v469
        %522 = vmatmul.bf16.gmra.mxu0 %v414
        %v523 = vpop.f32.mrf.mxu0
        %v524 = vadd.f32 %v417, %v523
        %v525 = vpop.f32.mrf.mxu0
        %v526 = vadd.f32 %v417, %v525
        %527 = vdwg.mxu0
        %v528 = vmax.f32 %v510, 0.0
        %v529 = vmax.f32 %v524, 0.0
        %v530 = vmax.f32 %v512, 0.0
        %v531 = vmax.f32 %v526, 0.0
        %v532 = vld [vmem:[#allocation10] sm:$0xf]
        %v533 = vld [vmem:[#allocation10 + $0x4] sm:$0xf]
        %v534 = vld [vmem:[#allocation10 + $0x8] sm:$0xf]
        %v535 = vld [vmem:[#allocation10 + $0xc] sm:$0xf]
        %v536 = vld [vmem:[#allocation10 + $0x10] sm:$0xf]
        %v537 = vld [vmem:[#allocation10 + $0x14] sm:$0xf]
        %v538 = vld [vmem:[#allocation10 + $0x18] sm:$0xf]
        %v539 = vld [vmem:[#allocation10 + $0x1c] sm:$0xf]
        %v540 = vld [vmem:[#allocation10 + $0x20] sm:$0xf]
        %v541 = vld [vmem:[#allocation10 + $0x24] sm:$0xf]
        %v542 = vld [vmem:[#allocation10 + $0x28] sm:$0xf]
        %v543 = vld [vmem:[#allocation10 + $0x2c] sm:$0xf]
        %v544 = vld [vmem:[#allocation10 + $0x30] sm:$0xf]
        %v545 = vld [vmem:[#allocation10 + $0x34] sm:$0xf]
        %v546 = vld [vmem:[#allocation10 + $0x38] sm:$0xf]
        %v547 = vld [vmem:[#allocation10 + $0x3c] sm:$0xf]
        %v548 = vld [vmem:[#allocation10 + $0x40] sm:$0xf]
        %v549 = vld [vmem:[#allocation10 + $0x44] sm:$0xf]
        %v550 = vld [vmem:[#allocation10 + $0x48] sm:$0xf]
        %v551 = vld [vmem:[#allocation10 + $0x4c] sm:$0xf]
        %v552 = vld [vmem:[#allocation10 + $0x50] sm:$0xf]
        %v553 = vld [vmem:[#allocation10 + $0x54] sm:$0xf]
        %v554 = vld [vmem:[#allocation10 + $0x58] sm:$0xf]
        %v555 = vld [vmem:[#allocation10 + $0x5c] sm:$0xf]
        %v556 = vld [vmem:[#allocation10 + $0x60] sm:$0xf]
        %v557 = vld [vmem:[#allocation10 + $0x64] sm:$0xf]
        %v558 = vld [vmem:[#allocation10 + $0x68] sm:$0xf]
        %v559 = vld [vmem:[#allocation10 + $0x6c] sm:$0xf]
        %v560 = vld [vmem:[#allocation10 + $0x70] sm:$0xf]
        %v561 = vld [vmem:[#allocation10 + $0x74] sm:$0xf]
        %v562 = vld [vmem:[#allocation10 + $0x78] sm:$0xf]
        %v563 = vld [vmem:[#allocation10 + $0x7c] sm:$0xf]
        %v564 = vld [vmem:[%s7] sm:$0x1]
        %v565 = vpack.c.bf16 %v530, %v528
        %v566 = vpack.c.bf16 %v531, %v529
        %v568 = vperm.slane %v564, 0
        %v602 = vunpack.c.l.b16 %v532
        %v603 = vunpack.c.l.b16 %v533
        %v604 = vunpack.c.l.b16 %v534
        %v605 = vunpack.c.l.b16 %v535
        %v606 = vunpack.c.l.b16 %v536
        %v607 = vunpack.c.l.b16 %v537
        %v608 = vunpack.c.l.b16 %v538
        %v609 = vunpack.c.l.b16 %v539
        %v610 = vunpack.c.l.b16 %v540
        %v611 = vunpack.c.l.b16 %v541
        %v612 = vunpack.c.l.b16 %v542
        %v613 = vunpack.c.l.b16 %v543
        %v614 = vunpack.c.l.b16 %v544
        %v615 = vunpack.c.l.b16 %v545
        %v616 = vunpack.c.l.b16 %v546
        %v617 = vunpack.c.l.b16 %v547
        %v618 = vunpack.c.l.b16 %v548
        %v619 = vunpack.c.l.b16 %v549
        %v620 = vunpack.c.l.b16 %v550
        %v621 = vunpack.c.l.b16 %v551
        %v622 = vunpack.c.l.b16 %v552
        %v623 = vunpack.c.l.b16 %v553
        %v624 = vunpack.c.l.b16 %v554
        %v625 = vunpack.c.l.b16 %v555
        %v626 = vunpack.c.l.b16 %v556
        %v627 = vunpack.c.l.b16 %v557
        %v628 = vunpack.c.l.b16 %v558
        %v629 = vunpack.c.l.b16 %v559
        %v630 = vunpack.c.l.b16 %v560
        %v631 = vunpack.c.l.b16 %v561
        %v632 = vunpack.c.l.b16 %v562
        %v633 = vunpack.c.l.b16 %v563
        %v634 = vpack.c.b16 %v603, %v602
        %v635 = vpack.c.b16 %v605, %v604
        %v636 = vpack.c.b16 %v607, %v606
        %v637 = vpack.c.b16 %v609, %v608
        %v638 = vpack.c.b16 %v611, %v610
        %v639 = vpack.c.b16 %v613, %v612
        %v640 = vpack.c.b16 %v615, %v614
        %v641 = vpack.c.b16 %v617, %v616
        %v642 = vpack.c.b16 %v619, %v618
        %v643 = vpack.c.b16 %v621, %v620
        %v644 = vpack.c.b16 %v623, %v622
        %v645 = vpack.c.b16 %v625, %v624
        %v646 = vpack.c.b16 %v627, %v626
        %v647 = vpack.c.b16 %v629, %v628
        %v648 = vpack.c.b16 %v631, %v630
        %v649 = vpack.c.b16 %v633, %v632
        %666 = vmatpush.bf16.msra.mxu0 %v641
        %667 = vmatpush.bf16.msra.mxu0 %v640
        %668 = vmatpush.bf16.msra.mxu0 %v639
        %669 = vmatpush.bf16.msra.mxu0 %v638
        %670 = vmatpush.bf16.msra.mxu0 %v637
        %671 = vmatpush.bf16.msra.mxu0 %v636
        %672 = vmatpush.bf16.msra.mxu0 %v635
        %673 = vmatpush.bf16.msra.mxu0 %v634
        %674 = vmatmul.bf16.gmra.mxu0 %v565
        %v675 = vpop.f32.mrf.mxu0
        %v676 = vadd.f32 %v568, %v675
        %v677 = vpop.f32.mrf.mxu0
        %v678 = vadd.f32 %v568, %v677
        %679 = vdwg.mxu0
        %680 = vmatpush.bf16.msra.mxu0 %v649
        %681 = vmatpush.bf16.msra.mxu0 %v648
        %682 = vmatpush.bf16.msra.mxu0 %v647
        %683 = vmatpush.bf16.msra.mxu0 %v646
        %684 = vmatpush.bf16.msra.mxu0 %v645
        %685 = vmatpush.bf16.msra.mxu0 %v644
        %686 = vmatpush.bf16.msra.mxu0 %v643
        %687 = vmatpush.bf16.msra.mxu0 %v642
        %688 = vmatmul.bf16.gmra.mxu0 %v566
        %v689 = vpop.f32.mrf.mxu0
        %v690 = vadd.f32 %v676, %v689
        %v691 = vpop.f32.mrf.mxu0
        %v692 = vadd.f32 %v678, %v691
        %693 = vdwg.mxu0
        %v694 = vlaneseq
        %v695 = vand.u32 %v694, 127
        %vm696 = vcmp.ge.s32.totalorder %v695, 8
        %vm697 = vcmp.lt.s32.totalorder %v695, 24
        %vm698 = vmand %vm696, %vm697
        %v699 = vmax.f32 %v690, 0.0
        %v700 = vmax.f32 %v692, 0.0
        %v701 = vsel %vm698, %v699, %v690
        %v702 = vsel %vm698, %v700, %v692
        %s703 = smul.u32 %s28, 16
        %v704 = vlaneseq
        %v705 = vshrl.u32 %v704, 7
        %v706 = vadd.s32 %v705, 8
        %v707 = vstv %s703
        %v708 = vadd.s32 %v705, %v707
        %v709 = vadd.s32 %v706, %v707
        %v710 = vmul.u32 %v708, 128
        %v711 = vmul.u32 %v709, 128
        %v712 = vadd.s32 %v710, %v695
        %v713 = vadd.s32 %v711, %v695
        %s714 = sld [smem:[#allocation3]]
        %s715 = smul.u32 %s714, 2654435761
        %s716 = sadd.s32 %s715, 2246822507
        %v717 = vstv %s716
        %v718 = vxor.u32 %v712, %v717
        %v719 = vxor.u32 %v713, %v717
        %v720 = vshrl.u32 %v718, 16
        %v721 = vshrl.u32 %v719, 16
        %v722 = vxor.u32 %v718, %v720
        %v723 = vxor.u32 %v719, %v721
        %v724 = vmul.u32 %v722, 2146121005
        %v725 = vmul.u32 %v723, 2146121005
        %v726 = vshrl.u32 %v724, 15
        %v727 = vshrl.u32 %v725, 15
        %v728 = vxor.u32 %v724, %v726
        %v729 = vxor.u32 %v725, %v727
        %v730 = vmul.u32 %v728, 2221713035
        %v731 = vmul.u32 %v729, 2221713035
        %v732 = vshrl.u32 %v730, 16
        %v733 = vshrl.u32 %v731, 16
        %v734 = vxor.u32 %v730, %v732
        %v735 = vxor.u32 %v731, %v733
        %v736 = vadd.s32 %v734, 2147483648
        %vm738 = vcmp.lt.s32.totalorder %v736, 1717986918
        %v739 = vadd.s32 %v735, 2147483648
        %vm741 = vcmp.lt.s32.totalorder %v739, 1717986918
        %v742 = vmul.f32 %v701, 1.1111112
        %v743 = vmul.f32 %v702, 1.1111112
        %v744 = vsel %vm738, %v742, 0.0
        %v745 = vsel %vm741, %v743, 0.0
        %746 = vst [vmem:[%s350] sm:$0xff] %v744
        %747 = vst [vmem:[%s350 + $0x8] sm:$0xff] %v745
        %s748 = sand.u32 %s188, 1
        %s749 = scalar_lea.sflag [#allocation6], %s748
        %s750 = sand.u32 %s188, 1
        %s751 = smul.addr %s750, 16
        %s752 = scalar_lea.vmem [#allocation12], %s751
        // Predicated region
        $region65: #{tpu_custom_call.1} parent=47 // pred_check
          %p753 = pneg %p198
        $region66: #{tpu_custom_call.1} parent=47 // pred_check_branch
          %755 = sbr.rel (%p753) target = $region68
        $region67: #{tpu_custom_call.1} parent=47 // pred_region
          %s756 = smul.u32 2, %s28
          %758 = vsyncadd %s749, 0
          %s759 = smul.addr %s756, 8
          %s760 = scalar_lea.hbm %s8, %s759
          %s761 = sshll.u32 %s752, 4
          %s762 = int_to_ptr.vmem [resolvable:$true] %s761
          %s763 = sshll.u32 %s760, 4
          %s764 = int_to_ptr.hbm [resolvable:$true] %s763
          %769 = dma.vmem_to_hbm [thread:$0]  %s762, 256, %s764, %s749, 128, 128, 8
        $region68: #{tpu_custom_call.1} parent=47 // pred_fallthru
          _
      $region48: #{tpu_custom_call.1} parent=5 // pred_fallthru
        _
      %p770 = scmp.le.s32.totalorder 2, %s23
      // Predicated region
      $region69: #{tpu_custom_call.1} parent=5 // pred_check
        %p771 = pneg %p770
      $region70: #{tpu_custom_call.1} parent=5 // pred_check_branch
        %773 = sbr.rel (%p771) target = $region72
      $region71: #{tpu_custom_call.1} parent=5 // pred_region
        %s774 = ssub.s32 %s23, 2
        // Predicated region
        $region73: #{tpu_custom_call.1} parent=71 // pred_check
          %p775 = pneg %p204
        $region74: #{tpu_custom_call.1} parent=71 // pred_check_branch
          %777 = sbr.rel (%p775) target = $region76
        $region75: #{tpu_custom_call.1} parent=71 // pred_region
          %s778 = sand.u32 %s189, 1
          %s779 = scalar_lea.sflag [#allocation6], %s778
          %s780 = sand.u32 %s189, 1
          %s781 = smul.addr %s780, 16
          %s782 = scalar_lea.vmem [#allocation12], %s781
          %784 = dma.done %s779, 256
        $region76: #{tpu_custom_call.1} parent=71 // pred_fallthru
          _
      $region72: #{tpu_custom_call.1} parent=5 // pred_fallthru
        _
    $region6: #{tpu_custom_call.1} parent=1 // loop_footer
      %s27 = sadd.s32 1, %s23
    $region7: #{tpu_custom_call.1} parent=1 // loop_footer_branch
      %22 = sbr.rel target = $region3
    $region8: #{tpu_custom_call.1} parent=1 // loop_exit
      _
    %785 = vsyncpa [#allocation5], 1
    %s786 = scalar_lea.sflag [#allocation5], 1
    %787 = vsyncpa %s786, 1
    %788 = vsyncpa [#allocation8], 1
    %789 = vsyncpa [#allocation11], 1
    %790 = vsyncpa [#allocation6], 1
    %s791 = scalar_lea.sflag [#allocation6], 1
    %792 = vsyncpa %s791, 1

</llo_original>
